<compile_context>
chip_gen: v6e
topology: v6e:2x2x1
jax: 0.10.0
libtpu: 0.0.40
codegen_flags: <defaults>
</compile_context>

<pallas_src>
import jax
import jax.numpy as jnp
from jax.experimental import pallas as pl
from jax.experimental.pallas import tpu as pltpu


def edgeconv_kernel(x_ref, w1_ref, b1_ref, w2row_ref, out_ref):
    TB, N, D = x_ref.shape
    H = w1_ref.shape[1]

    x = x_ref[...]                                          # (TB, N, D)

    # ---- scorer MLP -------------------------------------------------------
    # Linear1 on the MXU over all TB*N nodes at once (free relayout when N%8==0).
    xf = x.reshape(TB * N, D)                               # (TB*N, D)
    h = jnp.dot(xf, w1_ref[...], preferred_element_type=jnp.float32) + b1_ref[...]
    h = jnp.maximum(h, 0.0)                                 # (TB*N, H)

    # Linear2 (H -> 1) as VPU multiply + lane reduce.
    hw = h * w2row_ref[...]                                 # (TB*N, H)
    s = jnp.sum(hw.reshape(TB, N, H), axis=-1)              # (TB, N) per-node scores
    # (b2 omitted: softmax over the node axis is invariant to a constant shift.)

    # ---- softmax over the node axis, per graph -----------------------------
    m = jnp.max(s, axis=-1, keepdims=True)                  # (TB, 1)
    e = jnp.exp(s - m)                                      # (TB, N)
    denom = jnp.sum(e, axis=-1, keepdims=True)              # (TB, 1)
    a = e * pl.reciprocal(denom, approx=False)              # (TB, N)

    # ---- attention-weighted pool over nodes (VPU mul + sublane reduce) -----
    pooled = jnp.sum(a[:, :, None] * x, axis=1)             # (TB, D)
    out_ref[...] = pooled.astype(out_ref.dtype)


def _choose_tb(B, N, D, *, tb_cap=512, target_bytes=2 << 20):
    """Graphs per grid step: multiple of 8, feats block capped at a few MiB
    (well under the default scoped-VMEM limit even with double-buffering)."""
    per_graph_bytes = max(N * D * 4, 1)
    tb = min(tb_cap, max(8, target_bytes // per_graph_bytes))
    tb = max(8, (tb // 8) * 8)
    b8 = ((B + 7) // 8) * 8            # batch rounded up to a sublane multiple
    return min(tb, b8)


def edgeconv_forward(feats, w1, b1, w2, b2=None):
    """feats: (B, N, D) float32 -> (B, D) float32.

    b2 is accepted for parity with the PyTorch module but unused in the kernel
    (adding a constant to every node score does not change the softmax).
    """
    B, N, D = feats.shape
    H = w1.shape[1]

    TB = _choose_tb(B, N, D)
    B_pad = ((B + TB - 1) // TB) * TB
    if B_pad != B:
        feats = jnp.concatenate(
            [feats, jnp.zeros((B_pad - B, N, D), feats.dtype)], axis=0)

    b1_row = b1.reshape(1, H)
    w2_row = w2.reshape(1, H)          # (H, 1) column -> (1, H) row

    # TODO(synk): on v6e/v7x, optionally cast feats/w1 to bfloat16 for the first
    # matmul (keeping preferred_element_type=f32) if the model tolerates it.

    out = pl.pallas_call(
        edgeconv_kernel,
        out_shape=jax.ShapeDtypeStruct((B_pad, D), jnp.float32),
        grid_spec=pltpu.PrefetchScalarGridSpec(
            num_scalar_prefetch=0,
            grid=(B_pad // TB,),
            in_specs=[
                pl.BlockSpec((TB, N, D), lambda i: (i, 0, 0)),  # node feats tile
                pl.BlockSpec((D, H), lambda i: (0, 0)),         # W1 (whole)
                pl.BlockSpec((1, H), lambda i: (0, 0)),         # b1 row
                pl.BlockSpec((1, H), lambda i: (0, 0)),         # w2 row
            ],
            out_specs=pl.BlockSpec((TB, D), lambda i: (i, 0)),
        ),
        compiler_params=pltpu.CompilerParams(
            dimension_semantics=("parallel",)),   # 2-TC sharding on v7x
    )(feats, w1, b1_row, w2_row)

    return out[:B]


def edgeconv_reference(feats, w1, b1, w2, b2):
    """Pure-JAX reference matching the PyTorch forward."""
    h = jnp.maximum(jnp.einsum("bnd,dh->bnh", feats, w1) + b1, 0.0)
    s = jnp.einsum("bnh,ho->bno", h, w2) + b2                # (B, N, 1)
    a = jax.nn.softmax(s, axis=1)                            # softmax over nodes
    return jnp.sum(a * feats, axis=1)                        # (B, D)


if __name__ == "__main__":
    B, N, D, H = 10, 8, 4, 32   # graphs, nodes per graph, dim_in, hidden

    key = jax.random.PRNGKey(0)
    k_x, k_w1, k_b1, k_w2, k_b2 = jax.random.split(key, 5)

    feats = jax.random.normal(k_x, (B, N, D), dtype=jnp.float32)
    w1 = jax.random.normal(k_w1, (D, H), dtype=jnp.float32) * 0.1
    b1 = jax.random.normal(k_b1, (H,), dtype=jnp.float32) * 0.1
    w2 = jax.random.normal(k_w2, (H, 1), dtype=jnp.float32) * 0.1
    b2 = jax.random.normal(k_b2, (1,), dtype=jnp.float32) * 0.1

    out = edgeconv_forward(feats, w1, b1, w2, b2)
    out = jax.block_until_ready(out)

    ref = edgeconv_reference(feats, w1, b1, w2, b2)
    assert out.shape == (B, D)
    assert jnp.allclose(out, ref, atol=1e-5, rtol=1e-5), (out, ref)

    print("KERNEL_OK")
</pallas_src>

<mosaic_0001>
module attributes {stable_mosaic.version = 11 : i64} {
  func.func @edgeconv_kernel(%arg0: i32, %arg1: memref<16x8x4xf32, #tpu.memory_space<vmem>>, %arg2: memref<4x32xf32, #tpu.memory_space<vmem>>, %arg3: memref<1x32xf32, #tpu.memory_space<vmem>>, %arg4: memref<1x32xf32, #tpu.memory_space<vmem>>, %arg5: memref<16x4xf32, #tpu.memory_space<vmem>>) attributes {dimension_semantics = [#tpu.dimension_semantics<parallel>], iteration_bounds = array<i64: 1>, scalar_prefetch = 0 : i64, scratch_operands = 0 : i64, tpu.core_type = #tpu.core_type<tc>, window_params = [{transform_indices = @transform_0, window_bounds = array<i64: 16, 8, 4>}, {pipeline_mode = #tpu.pipeline_mode<synchronous>, transform_indices = @transform_1, window_bounds = array<i64: 4, 32>}, {pipeline_mode = #tpu.pipeline_mode<synchronous>, transform_indices = @transform_2, window_bounds = array<i64: 1, 32>}, {pipeline_mode = #tpu.pipeline_mode<synchronous>, transform_indices = @transform_3, window_bounds = array<i64: 1, 32>}, {transform_indices = @transform_4, window_bounds = array<i64: 16, 4>}]} {
    %c0 = arith.constant 0 : index
    %c0_0 = arith.constant 0 : index
    %c0_1 = arith.constant 0 : index
    %0 = vector.load %arg1[%c0, %c0_0, %c0_1] : memref<16x8x4xf32, #tpu.memory_space<vmem>>, vector<16x8x4xf32>
    %1 = vector.shape_cast %0 : vector<16x8x4xf32> to vector<128x4xf32>
    %c0_2 = arith.constant 0 : index
    %c0_3 = arith.constant 0 : index
    %2 = vector.load %arg2[%c0_2, %c0_3] : memref<4x32xf32, #tpu.memory_space<vmem>>, vector<4x32xf32>
    %cst = arith.constant dense<0.000000e+00> : vector<128x32xf32>
    %3 = tpu.matmul %1, %2, %cst {dimension_numbers = #tpu.dot_dimension_numbers<[1], [0], [0], [1], [0, 0, 1, 1], [], []>} : vector<128x4xf32>, vector<4x32xf32>, vector<128x32xf32> -> vector<128x32xf32>
    %c0_4 = arith.constant 0 : index
    %c0_5 = arith.constant 0 : index
    %4 = vector.load %arg3[%c0_4, %c0_5] : memref<1x32xf32, #tpu.memory_space<vmem>>, vector<1x32xf32>
    %5 = vector.broadcast %4 : vector<1x32xf32> to vector<128x32xf32>
    %6 = arith.addf %3, %5 : vector<128x32xf32>
    %cst_6 = arith.constant 0.000000e+00 : f32
    %7 = vector.broadcast %cst_6 : f32 to vector<128x32xf32>
    %8 = arith.maximumf %6, %7 : vector<128x32xf32>
    %c0_7 = arith.constant 0 : index
    %c0_8 = arith.constant 0 : index
    %9 = vector.load %arg4[%c0_7, %c0_8] : memref<1x32xf32, #tpu.memory_space<vmem>>, vector<1x32xf32>
    %10 = vector.broadcast %9 : vector<1x32xf32> to vector<128x32xf32>
    %11 = arith.mulf %8, %10 : vector<128x32xf32>
    %12 = vector.shape_cast %11 : vector<128x32xf32> to vector<16x8x32xf32>
    %cst_9 = arith.constant dense<0.000000e+00> : vector<16x8xf32>
    %13 = vector.multi_reduction <add>, %12, %cst_9 [2] : vector<16x8x32xf32> to vector<16x8xf32>
    %cst_10 = arith.constant dense<0xFF800000> : vector<16xf32>
    %14 = vector.multi_reduction <maximumf>, %13, %cst_10 [1] : vector<16x8xf32> to vector<16xf32>
    %15 = vector.shape_cast %14 : vector<16xf32> to vector<16x1xf32>
    %16 = vector.broadcast %15 : vector<16x1xf32> to vector<16x8xf32>
    %17 = arith.subf %13, %16 : vector<16x8xf32>
    %18 = math.exp %17 : vector<16x8xf32>
    %cst_11 = arith.constant dense<0.000000e+00> : vector<16xf32>
    %19 = vector.multi_reduction <add>, %18, %cst_11 [1] : vector<16x8xf32> to vector<16xf32>
    %20 = vector.shape_cast %19 : vector<16xf32> to vector<16x1xf32>
    %21 = tpu.reciprocal %20 : vector<16x1xf32> -> vector<16x1xf32>
    %22 = vector.broadcast %21 : vector<16x1xf32> to vector<16x8xf32>
    %23 = arith.mulf %18, %22 : vector<16x8xf32>
    %24 = vector.shape_cast %23 : vector<16x8xf32> to vector<16x8x1xf32>
    %25 = vector.broadcast %24 : vector<16x8x1xf32> to vector<16x8x4xf32>
    %26 = arith.mulf %25, %0 : vector<16x8x4xf32>
    %cst_12 = arith.constant dense<0.000000e+00> : vector<16x4xf32>
    %27 = vector.multi_reduction <add>, %26, %cst_12 [1] : vector<16x8x4xf32> to vector<16x4xf32>
    %c0_13 = arith.constant 0 : index
    %c0_14 = arith.constant 0 : index
    %28 = vector.load %arg5[%c0_13, %c0_14] : memref<16x4xf32, #tpu.memory_space<vmem>>, vector<16x4xf32>
    tpu.vector_store %arg5[%c0_13, %c0_14], %27 {strides = array<i32>} : memref<16x4xf32, #tpu.memory_space<vmem>>, vector<16x4xf32>,
    return
  }
  func.func @transform_0(%arg0: i32) -> (i32, i32, i32) {
    %c0_i32 = arith.constant 0 : i32
    %c0_i32_0 = arith.constant 0 : i32
    %c0_i32_1 = arith.constant 0 : i32
    return %arg0, %c0_i32, %c0_i32_0 : i32, i32, i32
  }
  func.func @transform_1(%arg0: i32) -> (i32, i32) {
    %c0_i32 = arith.constant 0 : i32
    %c0_i32_0 = arith.constant 0 : i32
    %c0_i32_1 = arith.constant 0 : i32
    return %c0_i32, %c0_i32_0 : i32, i32
  }
  func.func @transform_2(%arg0: i32) -> (i32, i32) {
    %c0_i32 = arith.constant 0 : i32
    %c0_i32_0 = arith.constant 0 : i32
    %c0_i32_1 = arith.constant 0 : i32
    return %c0_i32, %c0_i32_0 : i32, i32
  }
  func.func @transform_3(%arg0: i32) -> (i32, i32) {
    %c0_i32 = arith.constant 0 : i32
    %c0_i32_0 = arith.constant 0 : i32
    %c0_i32_1 = arith.constant 0 : i32
    return %c0_i32, %c0_i32_0 : i32, i32
  }
  func.func @transform_4(%arg0: i32) -> (i32, i32) {
    %c0_i32 = arith.constant 0 : i32
    %c0_i32_0 = arith.constant 0 : i32
    return %arg0, %c0_i32 : i32, i32
  }
}

</mosaic_0001>

<llo_original>
// kernel: tpu_custom_call.1
$region0: #{tpu_custom_call.1}
  #allocation0 [shape = 'u32[]', space=smem, size = 0x4, offset = 0x4, fixed_abs, tag = 'smem constant byte address 0x4 - core index']
  #allocation1 [shape = 'u32[144,128]{1,0:T(1,128)}', space=vmem, size = 0x12000, scoped, tag = 'internal scratch']
  %s0 = inlined_call_operand.vmem [shape: f32[16,8,4], index: 0, kind: input, shape index: {}]
  %s1 = inlined_call_operand.vmem [shape: f32[4,32], index: 1, kind: input, shape index: {}]
  %s2 = inlined_call_operand.vmem [shape: f32[1,32], index: 2, kind: input, shape index: {}]
  %s3 = inlined_call_operand.vmem [shape: f32[1,32], index: 3, kind: input, shape index: {}]
  %s4 = inlined_call_operand.vmem [shape: f32[16,4], index: 4, kind: output, shape index: {}]
  %s5 = sld [smem:[#allocation0]]
  $region26: #{tpu_custom_call.1} parent=0
    _
  %s7 = ssub.s32 1, %s5
  %s8 = scalar_select 0, %s7, %s5
  // Predicated region
  $region2: #{tpu_custom_call.1} parent=0 // pred_check
    _
  $region3: #{tpu_custom_call.1} parent=0 // pred_check_branch
    %10 = sbr.rel (0) target = $region5
  $region4: #{tpu_custom_call.1} parent=0 // pred_region
    _
  $region5: #{tpu_custom_call.1} parent=0 // pred_fallthru
    _
  // Predicated region
  $region6: #{tpu_custom_call.1} parent=0 // pred_check
    _
  $region7: #{tpu_custom_call.1} parent=0 // pred_check_branch
    %12 = sbr.rel (0) target = $region9
  $region8: #{tpu_custom_call.1} parent=0 // pred_region
    _
  $region9: #{tpu_custom_call.1} parent=0 // pred_fallthru
    _
  // Predicated region
  $region10: #{tpu_custom_call.1} parent=0 // pred_check
    _
  $region11: #{tpu_custom_call.1} parent=0 // pred_check_branch
    %14 = sbr.rel (0) target = $region13
  $region12: #{tpu_custom_call.1} parent=0 // pred_region
    _
  $region13: #{tpu_custom_call.1} parent=0 // pred_fallthru
    _
  // Predicated region
  $region14: #{tpu_custom_call.1} parent=0 // pred_check
    _
  $region15: #{tpu_custom_call.1} parent=0 // pred_check_branch
    %16 = sbr.rel (0) target = $region17
  $region16: #{tpu_custom_call.1} parent=0 // pred_region
    _
  $region17: #{tpu_custom_call.1} parent=0 // pred_fallthru
    _
  %v17 = vld [vmem:[%s0] sm:$0xff]
  %v18 = vld [vmem:[%s0 + $0x8] sm:$0xff]
  %v19 = vld [vmem:[%s0 + $0x10] sm:$0xff]
  %v20 = vld [vmem:[%s0 + $0x18] sm:$0xff]
  %v21 = vld [vmem:[%s0 + $0x20] sm:$0xff]
  %v22 = vld [vmem:[%s0 + $0x28] sm:$0xff]
  %v23 = vld [vmem:[%s0 + $0x30] sm:$0xff]
  %v24 = vld [vmem:[%s0 + $0x38] sm:$0xff]
  %v25 = vld [vmem:[%s0 + $0x40] sm:$0xff]
  %v26 = vld [vmem:[%s0 + $0x48] sm:$0xff]
  %v27 = vld [vmem:[%s0 + $0x50] sm:$0xff]
  %v28 = vld [vmem:[%s0 + $0x58] sm:$0xff]
  %v29 = vld [vmem:[%s0 + $0x60] sm:$0xff]
  %v30 = vld [vmem:[%s0 + $0x68] sm:$0xff]
  %v31 = vld [vmem:[%s0 + $0x70] sm:$0xff]
  %v32 = vld [vmem:[%s0 + $0x78] sm:$0xff]
  %v33 = vld [vmem:[%s1] sm:$0xf]
  %v34 = vld [vmem:[%s2] sm:$0x1]
  %v36 = vlaneseq
  %v37 = vshrl.u32 %v36, 7
  %v38 = vsub.s32 0, %v37
  %v39 = vrot.slane %v34, %v38
  %vm41 = vcmask 31744
  %v43 = vsel %vm41, %v17, 0
  %v46 = vsel %vm41, %v18, 0
  %v49 = vsel %vm41, %v19, 0
  %v52 = vsel %vm41, %v20, 0
  %v55 = vsel %vm41, %v21, 0
  %v58 = vsel %vm41, %v22, 0
  %v61 = vsel %vm41, %v23, 0
  %v64 = vsel %vm41, %v24, 0
  %v67 = vsel %vm41, %v25, 0
  %v70 = vsel %vm41, %v26, 0
  %v73 = vsel %vm41, %v27, 0
  %v76 = vsel %vm41, %v28, 0
  %v79 = vsel %vm41, %v29, 0
  %v82 = vsel %vm41, %v30, 0
  %v85 = vsel %vm41, %v31, 0
  %v88 = vsel %vm41, %v32, 0
  %vm90 = vcmask 1043456
  %v92 = vsel %vm90, %v33, 0
  %94 = vmatprep.subr.mxu0 0.0
  %95 = vmatpush1.msra.mxu0 0.0
  %96 = vmatprep.subr.mxu0 0.0
  %97 = vmatpush1.msra.mxu0 0.0
  %98 = vmatprep.subr.mxu0 0.0
  %99 = vmatpush1.msra.mxu0 0.0
  %100 = vmatprep.subr.mxu0 0.0
  %101 = vmatpush1.msra.mxu0 0.0
  %102 = vmatprep.subr.mxu0 0.0
  %103 = vmatpush1.msra.mxu0 0.0
  %104 = vmatprep.subr.mxu0 0.0
  %105 = vmatpush1.msra.mxu0 0.0
  %106 = vmatprep.subr.mxu0 0.0
  %107 = vmatpush1.msra.mxu0 0.0
  %108 = vmatprep.subr.mxu0 0.0
  %109 = vmatpush1.msra.mxu0 0.0
  %110 = vmatprep.subr.mxu0 0.0
  %111 = vmatpush1.msra.mxu0 0.0
  %112 = vmatprep.subr.mxu0 0.0
  %113 = vmatpush1.msra.mxu0 0.0
  %114 = vmatprep.subr.mxu0 0.0
  %115 = vmatpush1.msra.mxu0 0.0
  %116 = vmatprep.subr.mxu0 0.0
  %117 = vmatpush1.msra.mxu0 0.0
  %118 = vmatprep.subr.mxu0 0.0
  %119 = vmatpush1.msra.mxu0 0.0
  %120 = vmatprep.subr.mxu0 0.0
  %121 = vmatpush1.msra.mxu0 0.0
  %122 = vmatprep.subr.mxu0 0.0
  %123 = vmatpush1.msra.mxu0 0.0
  %124 = vmatprep.subr.mxu0 0.0
  %125 = vmatpush1.msra.mxu0 %v92
  %126 = vmatprep.subr.mxu0 0.0
  %127 = vmatpush2.msra.mxu0 0.0
  %128 = vmatprep.subr.mxu0 0.0
  %129 = vmatpush2.msra.mxu0 0.0
  %130 = vmatprep.subr.mxu0 0.0
  %131 = vmatpush2.msra.mxu0 0.0
  %132 = vmatprep.subr.mxu0 0.0
  %133 = vmatpush2.msra.mxu0 0.0
  %134 = vmatprep.subr.mxu0 0.0
  %135 = vmatpush2.msra.mxu0 0.0
  %136 = vmatprep.subr.mxu0 0.0
  %137 = vmatpush2.msra.mxu0 0.0
  %138 = vmatprep.subr.mxu0 0.0
  %139 = vmatpush2.msra.mxu0 0.0
  %140 = vmatprep.subr.mxu0 0.0
  %141 = vmatpush2.msra.mxu0 0.0
  %142 = vmatprep.subr.mxu0 0.0
  %143 = vmatpush2.msra.mxu0 0.0
  %144 = vmatprep.subr.mxu0 0.0
  %145 = vmatpush2.msra.mxu0 0.0
  %146 = vmatprep.subr.mxu0 0.0
  %147 = vmatpush2.msra.mxu0 0.0
  %148 = vmatprep.subr.mxu0 0.0
  %149 = vmatpush2.msra.mxu0 0.0
  %150 = vmatprep.subr.mxu0 0.0
  %151 = vmatpush2.msra.mxu0 0.0
  %152 = vmatprep.subr.mxu0 0.0
  %153 = vmatpush2.msra.mxu0 0.0
  %154 = vmatprep.subr.mxu0 0.0
  %155 = vmatpush2.msra.mxu0 0.0
  %156 = vmatprep.subr.mxu0 0.0
  %157 = vmatpush2.msra.mxu0 0.0
  %158 = vmatprep.mubr.f32.mxu0 0.0
  %159 = vmatmul.mubr.f32.gmra.mxu0 %v43
  %v160 = vpop.f32.mrf.mxu0
  %v161 = vadd.f32 %v39, %v160
  %v162 = vpop.f32.mrf.mxu0
  %163 = vmatprep.mubr.f32.mxu0 0.0
  %164 = vmatmul.mubr.f32.gmra.mxu0 %v46
  %v165 = vpop.f32.mrf.mxu0
  %v166 = vadd.f32 %v39, %v165
  %v167 = vpop.f32.mrf.mxu0
  %168 = vmatprep.mubr.f32.mxu0 0.0
  %169 = vmatmul.mubr.f32.gmra.mxu0 %v49
  %v170 = vpop.f32.mrf.mxu0
  %v171 = vadd.f32 %v39, %v170
  %v172 = vpop.f32.mrf.mxu0
  %173 = vmatprep.mubr.f32.mxu0 0.0
  %174 = vmatmul.mubr.f32.gmra.mxu0 %v52
  %v175 = vpop.f32.mrf.mxu0
  %v176 = vadd.f32 %v39, %v175
  %v177 = vpop.f32.mrf.mxu0
  %178 = vmatprep.mubr.f32.mxu0 0.0
  %179 = vmatmul.mubr.f32.gmra.mxu0 %v55
  %v180 = vpop.f32.mrf.mxu0
  %v181 = vadd.f32 %v39, %v180
  %v182 = vpop.f32.mrf.mxu0
  %183 = vmatprep.mubr.f32.mxu0 0.0
  %184 = vmatmul.mubr.f32.gmra.mxu0 %v58
  %v185 = vpop.f32.mrf.mxu0
  %v186 = vadd.f32 %v39, %v185
  %v187 = vpop.f32.mrf.mxu0
  %188 = vmatprep.mubr.f32.mxu0 0.0
  %189 = vmatmul.mubr.f32.gmra.mxu0 %v61
  %v190 = vpop.f32.mrf.mxu0
  %v191 = vadd.f32 %v39, %v190
  %v192 = vpop.f32.mrf.mxu0
  %193 = vmatprep.mubr.f32.mxu0 0.0
  %194 = vmatmul.mubr.f32.gmra.mxu0 %v64
  %v195 = vpop.f32.mrf.mxu0
  %v196 = vadd.f32 %v39, %v195
  %v197 = vpop.f32.mrf.mxu0
  %198 = vmatprep.mubr.f32.mxu0 0.0
  %199 = vmatmul.mubr.f32.gmra.mxu0 %v67
  %v200 = vpop.f32.mrf.mxu0
  %v201 = vadd.f32 %v39, %v200
  %v202 = vpop.f32.mrf.mxu0
  %203 = vmatprep.mubr.f32.mxu0 0.0
  %204 = vmatmul.mubr.f32.gmra.mxu0 %v70
  %v205 = vpop.f32.mrf.mxu0
  %v206 = vadd.f32 %v39, %v205
  %v207 = vpop.f32.mrf.mxu0
  %208 = vmatprep.mubr.f32.mxu0 0.0
  %209 = vmatmul.mubr.f32.gmra.mxu0 %v73
  %v210 = vpop.f32.mrf.mxu0
  %v211 = vadd.f32 %v39, %v210
  %v212 = vpop.f32.mrf.mxu0
  %213 = vmatprep.mubr.f32.mxu0 0.0
  %214 = vmatmul.mubr.f32.gmra.mxu0 %v76
  %v215 = vpop.f32.mrf.mxu0
  %v216 = vadd.f32 %v39, %v215
  %v217 = vpop.f32.mrf.mxu0
  %218 = vmatprep.mubr.f32.mxu0 0.0
  %219 = vmatmul.mubr.f32.gmra.mxu0 %v79
  %v220 = vpop.f32.mrf.mxu0
  %v221 = vadd.f32 %v39, %v220
  %v222 = vpop.f32.mrf.mxu0
  %223 = vmatprep.mubr.f32.mxu0 0.0
  %224 = vmatmul.mubr.f32.gmra.mxu0 %v82
  %v225 = vpop.f32.mrf.mxu0
  %v226 = vadd.f32 %v39, %v225
  %v227 = vpop.f32.mrf.mxu0
  %228 = vmatprep.mubr.f32.mxu0 0.0
  %229 = vmatmul.mubr.f32.gmra.mxu0 %v85
  %v230 = vpop.f32.mrf.mxu0
  %v231 = vadd.f32 %v39, %v230
  %v232 = vpop.f32.mrf.mxu0
  %233 = vmatprep.mubr.f32.mxu0 0.0
  %234 = vmatmul.mubr.f32.gmra.mxu0 %v88
  %v235 = vpop.f32.mrf.mxu0
  %v236 = vadd.f32 %v39, %v235
  %v237 = vpop.f32.mrf.mxu0
  %238 = vdwg.mxu0
  %v239 = vmax.f32 %v161, 0.0
  %v240 = vmax.f32 %v166, 0.0
  %v241 = vmax.f32 %v171, 0.0
  %v242 = vmax.f32 %v176, 0.0
  %v243 = vmax.f32 %v181, 0.0
  %v244 = vmax.f32 %v186, 0.0
  %v245 = vmax.f32 %v191, 0.0
  %v246 = vmax.f32 %v196, 0.0
  %v247 = vmax.f32 %v201, 0.0
  %v248 = vmax.f32 %v206, 0.0
  %v249 = vmax.f32 %v211, 0.0
  %v250 = vmax.f32 %v216, 0.0
  %v251 = vmax.f32 %v221, 0.0
  %v252 = vmax.f32 %v226, 0.0
  %v253 = vmax.f32 %v231, 0.0
  %v254 = vmax.f32 %v236, 0.0
  %v255 = vld [vmem:[%s3] sm:$0x1]
  %v257 = vlaneseq
  %v258 = vshrl.u32 %v257, 7
  %v259 = vsub.s32 0, %v258
  %v260 = vrot.slane %v255, %v259
  %v262 = vmul.f32 %v239, %v260
  %v263 = vmul.f32 %v240, %v260
  %v264 = vmul.f32 %v241, %v260
  %v265 = vmul.f32 %v242, %v260
  %v266 = vmul.f32 %v243, %v260
  %v267 = vmul.f32 %v244, %v260
  %v268 = vmul.f32 %v245, %v260
  %v269 = vmul.f32 %v246, %v260
  %v270 = vmul.f32 %v247, %v260
  %v271 = vmul.f32 %v248, %v260
  %v272 = vmul.f32 %v249, %v260
  %v273 = vmul.f32 %v250, %v260
  %v274 = vmul.f32 %v251, %v260
  %v275 = vmul.f32 %v252, %v260
  %v276 = vmul.f32 %v253, %v260
  %v277 = vmul.f32 %v254, %v260
  %vm278 = vcmask 261120
  %v279 = vsel %vm278, %v262, 0.0
  %280 = vadd.xlane.f32.xlu0 %v279
  %v281 = vpop.xlane.xlu0 %280
  %v282 = vsel %vm278, %v263, 0.0
  %283 = vadd.xlane.f32.xlu0 %v282
  %v284 = vpop.xlane.xlu0 %283
  %v285 = vsel %vm278, %v264, 0.0
  %286 = vadd.xlane.f32.xlu0 %v285
  %v287 = vpop.xlane.xlu0 %286
  %v288 = vsel %vm278, %v265, 0.0
  %289 = vadd.xlane.f32.xlu0 %v288
  %v290 = vpop.xlane.xlu0 %289
  %v291 = vsel %vm278, %v266, 0.0
  %292 = vadd.xlane.f32.xlu0 %v291
  %v293 = vpop.xlane.xlu0 %292
  %v294 = vsel %vm278, %v267, 0.0
  %295 = vadd.xlane.f32.xlu0 %v294
  %v296 = vpop.xlane.xlu0 %295
  %v297 = vsel %vm278, %v268, 0.0
  %298 = vadd.xlane.f32.xlu0 %v297
  %v299 = vpop.xlane.xlu0 %298
  %v300 = vsel %vm278, %v269, 0.0
  %301 = vadd.xlane.f32.xlu0 %v300
  %v302 = vpop.xlane.xlu0 %301
  %v303 = vsel %vm278, %v270, 0.0
  %304 = vadd.xlane.f32.xlu0 %v303
  %v305 = vpop.xlane.xlu0 %304
  %v306 = vsel %vm278, %v271, 0.0
  %307 = vadd.xlane.f32.xlu0 %v306
  %v308 = vpop.xlane.xlu0 %307
  %v309 = vsel %vm278, %v272, 0.0
  %310 = vadd.xlane.f32.xlu0 %v309
  %v311 = vpop.xlane.xlu0 %310
  %v312 = vsel %vm278, %v273, 0.0
  %313 = vadd.xlane.f32.xlu0 %v312
  %v314 = vpop.xlane.xlu0 %313
  %v315 = vsel %vm278, %v274, 0.0
  %316 = vadd.xlane.f32.xlu0 %v315
  %v317 = vpop.xlane.xlu0 %316
  %v318 = vsel %vm278, %v275, 0.0
  %319 = vadd.xlane.f32.xlu0 %v318
  %v320 = vpop.xlane.xlu0 %319
  %v321 = vsel %vm278, %v276, 0.0
  %322 = vadd.xlane.f32.xlu0 %v321
  %v323 = vpop.xlane.xlu0 %322
  %v324 = vsel %vm278, %v277, 0.0
  %325 = vadd.xlane.f32.xlu0 %v324
  %v326 = vpop.xlane.xlu0 %325
  %v343 = vlaneseq
  %v344 = vand.u32 %v343, 127
  %v345 = vlaneseq
  %v346 = vshrl.u32 %v345, 7
  %v347 = vsub.s32 %v344, %v346
  %v348 = vrot.slane %v281, %v347
  %v349 = vlaneseq
  %v350 = vshrl.u32 %v349, 7
  %v351 = vsub.s32 %v344, %v350
  %v352 = vrot.slane %v284, %v351
  %v353 = vlaneseq
  %v354 = vshrl.u32 %v353, 7
  %v355 = vsub.s32 %v344, %v354
  %v356 = vrot.slane %v287, %v355
  %v357 = vlaneseq
  %v358 = vshrl.u32 %v357, 7
  %v359 = vsub.s32 %v344, %v358
  %v360 = vrot.slane %v290, %v359
  %v361 = vlaneseq
  %v362 = vshrl.u32 %v361, 7
  %v363 = vsub.s32 %v344, %v362
  %v364 = vrot.slane %v293, %v363
  %v365 = vlaneseq
  %v366 = vshrl.u32 %v365, 7
  %v367 = vsub.s32 %v344, %v366
  %v368 = vrot.slane %v296, %v367
  %v369 = vlaneseq
  %v370 = vshrl.u32 %v369, 7
  %v371 = vsub.s32 %v344, %v370
  %v372 = vrot.slane %v299, %v371
  %v373 = vlaneseq
  %v374 = vshrl.u32 %v373, 7
  %v375 = vsub.s32 %v344, %v374
  %v376 = vrot.slane %v302, %v375
  %v377 = vlaneseq
  %v378 = vshrl.u32 %v377, 7
  %v379 = vsub.s32 %v344, %v378
  %v380 = vrot.slane %v305, %v379
  %v381 = vlaneseq
  %v382 = vshrl.u32 %v381, 7
  %v383 = vsub.s32 %v344, %v382
  %v384 = vrot.slane %v308, %v383
  %v385 = vlaneseq
  %v386 = vshrl.u32 %v385, 7
  %v387 = vsub.s32 %v344, %v386
  %v388 = vrot.slane %v311, %v387
  %v389 = vlaneseq
  %v390 = vshrl.u32 %v389, 7
  %v391 = vsub.s32 %v344, %v390
  %v392 = vrot.slane %v314, %v391
  %v393 = vlaneseq
  %v394 = vshrl.u32 %v393, 7
  %v395 = vsub.s32 %v344, %v394
  %v396 = vrot.slane %v317, %v395
  %v397 = vlaneseq
  %v398 = vshrl.u32 %v397, 7
  %v399 = vsub.s32 %v344, %v398
  %v400 = vrot.slane %v320, %v399
  %v401 = vlaneseq
  %v402 = vshrl.u32 %v401, 7
  %v403 = vsub.s32 %v344, %v402
  %v404 = vrot.slane %v323, %v403
  %v405 = vlaneseq
  %v406 = vshrl.u32 %v405, 7
  %v407 = vsub.s32 %v344, %v406
  %v408 = vrot.slane %v326, %v407
  %vm409 = vcmask 1041409
  %v410 = vsel %vm409, %v352, %v348
  %vm411 = vcmask 1042434
  %v412 = vsel %vm411, %v356, %v410
  %vm413 = vcmask 1043459
  %v414 = vsel %vm413, %v360, %v412
  %vm415 = vcmask 1044484
  %v416 = vsel %vm415, %v364, %v414
  %vm417 = vcmask 1045509
  %v418 = vsel %vm417, %v368, %v416
  %vm419 = vcmask 1046534
  %v420 = vsel %vm419, %v372, %v418
  %vm421 = vcmask 1047559
  %v422 = vsel %vm421, %v376, %v420
  %v423 = vsel %vm409, %v384, %v380
  %v424 = vsel %vm411, %v388, %v423
  %v425 = vsel %vm413, %v392, %v424
  %v426 = vsel %vm415, %v396, %v425
  %v427 = vsel %vm417, %v400, %v426
  %v428 = vsel %vm419, %v404, %v427
  %v429 = vsel %vm421, %v408, %v428
  %vm432 = vcmask 64512
  %v433 = vsel %vm432, %v422, -inf
  %434 = vmax.xlane.f32.xlu0 %v433
  %v435 = vpop.xlane.xlu0 %434
  %v436 = vsel %vm432, %v429, -inf
  %437 = vmax.xlane.f32.xlu0 %v436
  %v438 = vpop.xlane.xlu0 %437
  %v441 = vlaneseq
  %v442 = vshrl.u32 %v441, 7
  %v443 = vsub.s32 0, %v442
  %v444 = vrot.slane %v435, %v443
  %v445 = vlaneseq
  %v446 = vshrl.u32 %v445, 7
  %v447 = vsub.s32 1, %v446
  %v448 = vrot.slane %v435, %v447
  %v449 = vlaneseq
  %v450 = vshrl.u32 %v449, 7
  %v451 = vsub.s32 2, %v450
  %v452 = vrot.slane %v435, %v451
  %v453 = vlaneseq
  %v454 = vshrl.u32 %v453, 7
  %v455 = vsub.s32 3, %v454
  %v456 = vrot.slane %v435, %v455
  %v457 = vlaneseq
  %v458 = vshrl.u32 %v457, 7
  %v459 = vsub.s32 4, %v458
  %v460 = vrot.slane %v435, %v459
  %v461 = vlaneseq
  %v462 = vshrl.u32 %v461, 7
  %v463 = vsub.s32 5, %v462
  %v464 = vrot.slane %v435, %v463
  %v465 = vlaneseq
  %v466 = vshrl.u32 %v465, 7
  %v467 = vsub.s32 6, %v466
  %v468 = vrot.slane %v435, %v467
  %v469 = vlaneseq
  %v470 = vshrl.u32 %v469, 7
  %v471 = vsub.s32 7, %v470
  %v472 = vrot.slane %v435, %v471
  %v473 = vlaneseq
  %v474 = vshrl.u32 %v473, 7
  %v475 = vsub.s32 0, %v474
  %v476 = vrot.slane %v438, %v475
  %v477 = vlaneseq
  %v478 = vshrl.u32 %v477, 7
  %v479 = vsub.s32 1, %v478
  %v480 = vrot.slane %v438, %v479
  %v481 = vlaneseq
  %v482 = vshrl.u32 %v481, 7
  %v483 = vsub.s32 2, %v482
  %v484 = vrot.slane %v438, %v483
  %v485 = vlaneseq
  %v486 = vshrl.u32 %v485, 7
  %v487 = vsub.s32 3, %v486
  %v488 = vrot.slane %v438, %v487
  %v489 = vlaneseq
  %v490 = vshrl.u32 %v489, 7
  %v491 = vsub.s32 4, %v490
  %v492 = vrot.slane %v438, %v491
  %v493 = vlaneseq
  %v494 = vshrl.u32 %v493, 7
  %v495 = vsub.s32 5, %v494
  %v496 = vrot.slane %v438, %v495
  %v497 = vlaneseq
  %v498 = vshrl.u32 %v497, 7
  %v499 = vsub.s32 6, %v498
  %v500 = vrot.slane %v438, %v499
  %v501 = vlaneseq
  %v502 = vshrl.u32 %v501, 7
  %v503 = vsub.s32 7, %v502
  %v504 = vrot.slane %v438, %v503
  %v521 = vsub.f32 %v281, %v444
  %v522 = vsub.f32 %v284, %v448
  %v523 = vsub.f32 %v287, %v452
  %v524 = vsub.f32 %v290, %v456
  %v525 = vsub.f32 %v293, %v460
  %v526 = vsub.f32 %v296, %v464
  %v527 = vsub.f32 %v299, %v468
  %v528 = vsub.f32 %v302, %v472
  %v529 = vsub.f32 %v305, %v476
  %v530 = vsub.f32 %v308, %v480
  %v531 = vsub.f32 %v311, %v484
  %v532 = vsub.f32 %v314, %v488
  %v533 = vsub.f32 %v317, %v492
  %v534 = vsub.f32 %v320, %v496
  %v535 = vsub.f32 %v323, %v500
  %v536 = vsub.f32 %v326, %v504
  %v537 = vmul.f32 %v521, 1.442695
  %v538 = vpow.pop %v537
  %v539 = vmul.f32 %v522, 1.442695
  %v540 = vpow.pop %v539
  %v541 = vmul.f32 %v523, 1.442695
  %v542 = vpow.pop %v541
  %v543 = vmul.f32 %v524, 1.442695
  %v544 = vpow.pop %v543
  %v545 = vmul.f32 %v525, 1.442695
  %v546 = vpow.pop %v545
  %v547 = vmul.f32 %v526, 1.442695
  %v548 = vpow.pop %v547
  %v549 = vmul.f32 %v527, 1.442695
  %v550 = vpow.pop %v549
  %v551 = vmul.f32 %v528, 1.442695
  %v552 = vpow.pop %v551
  %v553 = vmul.f32 %v529, 1.442695
  %v554 = vpow.pop %v553
  %v555 = vmul.f32 %v530, 1.442695
  %v556 = vpow.pop %v555
  %v557 = vmul.f32 %v531, 1.442695
  %v558 = vpow.pop %v557
  %v559 = vmul.f32 %v532, 1.442695
  %v560 = vpow.pop %v559
  %v561 = vmul.f32 %v533, 1.442695
  %v562 = vpow.pop %v561
  %v563 = vmul.f32 %v534, 1.442695
  %v564 = vpow.pop %v563
  %v565 = vmul.f32 %v535, 1.442695
  %v566 = vpow.pop %v565
  %v567 = vmul.f32 %v536, 1.442695
  %v568 = vpow.pop %v567
  %585 = vset.pattern.permute.xlu0 0
  %586 = vperm.xlu0 %585, %v538
  %v587 = vpop.permute.xlu0 %586
  %588 = vset.pattern.permute.xlu0 0
  %589 = vperm.xlu0 %588, %v540
  %v590 = vpop.permute.xlu0 %589
  %591 = vset.pattern.permute.xlu0 0
  %592 = vperm.xlu0 %591, %v542
  %v593 = vpop.permute.xlu0 %592
  %594 = vset.pattern.permute.xlu0 0
  %595 = vperm.xlu0 %594, %v544
  %v596 = vpop.permute.xlu0 %595
  %597 = vset.pattern.permute.xlu0 0
  %598 = vperm.xlu0 %597, %v546
  %v599 = vpop.permute.xlu0 %598
  %600 = vset.pattern.permute.xlu0 0
  %601 = vperm.xlu0 %600, %v548
  %v602 = vpop.permute.xlu0 %601
  %603 = vset.pattern.permute.xlu0 0
  %604 = vperm.xlu0 %603, %v550
  %v605 = vpop.permute.xlu0 %604
  %606 = vset.pattern.permute.xlu0 0
  %607 = vperm.xlu0 %606, %v552
  %v608 = vpop.permute.xlu0 %607
  %609 = vset.pattern.permute.xlu0 0
  %610 = vperm.xlu0 %609, %v554
  %v611 = vpop.permute.xlu0 %610
  %612 = vset.pattern.permute.xlu0 0
  %613 = vperm.xlu0 %612, %v556
  %v614 = vpop.permute.xlu0 %613
  %615 = vset.pattern.permute.xlu0 0
  %616 = vperm.xlu0 %615, %v558
  %v617 = vpop.permute.xlu0 %616
  %618 = vset.pattern.permute.xlu0 0
  %619 = vperm.xlu0 %618, %v560
  %v620 = vpop.permute.xlu0 %619
  %621 = vset.pattern.permute.xlu0 0
  %622 = vperm.xlu0 %621, %v562
  %v623 = vpop.permute.xlu0 %622
  %624 = vset.pattern.permute.xlu0 0
  %625 = vperm.xlu0 %624, %v564
  %v626 = vpop.permute.xlu0 %625
  %627 = vset.pattern.permute.xlu0 0
  %628 = vperm.xlu0 %627, %v566
  %v629 = vpop.permute.xlu0 %628
  %630 = vset.pattern.permute.xlu0 0
  %631 = vperm.xlu0 %630, %v568
  %v632 = vpop.permute.xlu0 %631
  %v633 = vlaneseq
  %v634 = vshrl.u32 %v633, 7
  %v635 = vsub.s32 %v344, %v634
  %v636 = vrot.slane %v587, %v635
  %v637 = vlaneseq
  %v638 = vshrl.u32 %v637, 7
  %v639 = vsub.s32 %v344, %v638
  %v640 = vrot.slane %v590, %v639
  %v641 = vlaneseq
  %v642 = vshrl.u32 %v641, 7
  %v643 = vsub.s32 %v344, %v642
  %v644 = vrot.slane %v593, %v643
  %v645 = vlaneseq
  %v646 = vshrl.u32 %v645, 7
  %v647 = vsub.s32 %v344, %v646
  %v648 = vrot.slane %v596, %v647
  %v649 = vlaneseq
  %v650 = vshrl.u32 %v649, 7
  %v651 = vsub.s32 %v344, %v650
  %v652 = vrot.slane %v599, %v651
  %v653 = vlaneseq
  %v654 = vshrl.u32 %v653, 7
  %v655 = vsub.s32 %v344, %v654
  %v656 = vrot.slane %v602, %v655
  %v657 = vlaneseq
  %v658 = vshrl.u32 %v657, 7
  %v659 = vsub.s32 %v344, %v658
  %v660 = vrot.slane %v605, %v659
  %v661 = vlaneseq
  %v662 = vshrl.u32 %v661, 7
  %v663 = vsub.s32 %v344, %v662
  %v664 = vrot.slane %v608, %v663
  %v665 = vlaneseq
  %v666 = vshrl.u32 %v665, 7
  %v667 = vsub.s32 %v344, %v666
  %v668 = vrot.slane %v611, %v667
  %v669 = vlaneseq
  %v670 = vshrl.u32 %v669, 7
  %v671 = vsub.s32 %v344, %v670
  %v672 = vrot.slane %v614, %v671
  %v673 = vlaneseq
  %v674 = vshrl.u32 %v673, 7
  %v675 = vsub.s32 %v344, %v674
  %v676 = vrot.slane %v617, %v675
  %v677 = vlaneseq
  %v678 = vshrl.u32 %v677, 7
  %v679 = vsub.s32 %v344, %v678
  %v680 = vrot.slane %v620, %v679
  %v681 = vlaneseq
  %v682 = vshrl.u32 %v681, 7
  %v683 = vsub.s32 %v344, %v682
  %v684 = vrot.slane %v623, %v683
  %v685 = vlaneseq
  %v686 = vshrl.u32 %v685, 7
  %v687 = vsub.s32 %v344, %v686
  %v688 = vrot.slane %v626, %v687
  %v689 = vlaneseq
  %v690 = vshrl.u32 %v689, 7
  %v691 = vsub.s32 %v344, %v690
  %v692 = vrot.slane %v629, %v691
  %v693 = vlaneseq
  %v694 = vshrl.u32 %v693, 7
  %v695 = vsub.s32 %v344, %v694
  %v696 = vrot.slane %v632, %v695
  %v697 = vsel %vm409, %v640, %v636
  %v698 = vsel %vm411, %v644, %v697
  %v699 = vsel %vm413, %v648, %v698
  %v700 = vsel %vm415, %v652, %v699
  %v701 = vsel %vm417, %v656, %v700
  %v702 = vsel %vm419, %v660, %v701
  %v703 = vsel %vm421, %v664, %v702
  %v704 = vsel %vm409, %v672, %v668
  %v705 = vsel %vm411, %v676, %v704
  %v706 = vsel %vm413, %v680, %v705
  %v707 = vsel %vm415, %v684, %v706
  %v708 = vsel %vm417, %v688, %v707
  %v709 = vsel %vm419, %v692, %v708
  %v710 = vsel %vm421, %v696, %v709
  %v713 = vsel %vm432, %v703, 0.0
  %714 = vadd.xlane.f32.xlu0 %v713
  %v715 = vpop.xlane.xlu0 %714
  %v716 = vsel %vm432, %v710, 0.0
  %717 = vadd.xlane.f32.xlu0 %v716
  %v718 = vpop.xlane.xlu0 %717
  %v719 = vrcp.pop %v715
  %v720 = vrcp.pop %v718
  %v723 = vlaneseq
  %v724 = vshrl.u32 %v723, 7
  %v725 = vsub.s32 0, %v724
  %v726 = vrot.slane %v719, %v725
  %v727 = vlaneseq
  %v728 = vshrl.u32 %v727, 7
  %v729 = vsub.s32 1, %v728
  %v730 = vrot.slane %v719, %v729
  %v731 = vlaneseq
  %v732 = vshrl.u32 %v731, 7
  %v733 = vsub.s32 2, %v732
  %v734 = vrot.slane %v719, %v733
  %v735 = vlaneseq
  %v736 = vshrl.u32 %v735, 7
  %v737 = vsub.s32 3, %v736
  %v738 = vrot.slane %v719, %v737
  %v739 = vlaneseq
  %v740 = vshrl.u32 %v739, 7
  %v741 = vsub.s32 4, %v740
  %v742 = vrot.slane %v719, %v741
  %v743 = vlaneseq
  %v744 = vshrl.u32 %v743, 7
  %v745 = vsub.s32 5, %v744
  %v746 = vrot.slane %v719, %v745
  %v747 = vlaneseq
  %v748 = vshrl.u32 %v747, 7
  %v749 = vsub.s32 6, %v748
  %v750 = vrot.slane %v719, %v749
  %v751 = vlaneseq
  %v752 = vshrl.u32 %v751, 7
  %v753 = vsub.s32 7, %v752
  %v754 = vrot.slane %v719, %v753
  %v755 = vlaneseq
  %v756 = vshrl.u32 %v755, 7
  %v757 = vsub.s32 0, %v756
  %v758 = vrot.slane %v720, %v757
  %v759 = vlaneseq
  %v760 = vshrl.u32 %v759, 7
  %v761 = vsub.s32 1, %v760
  %v762 = vrot.slane %v720, %v761
  %v763 = vlaneseq
  %v764 = vshrl.u32 %v763, 7
  %v765 = vsub.s32 2, %v764
  %v766 = vrot.slane %v720, %v765
  %v767 = vlaneseq
  %v768 = vshrl.u32 %v767, 7
  %v769 = vsub.s32 3, %v768
  %v770 = vrot.slane %v720, %v769
  %v771 = vlaneseq
  %v772 = vshrl.u32 %v771, 7
  %v773 = vsub.s32 4, %v772
  %v774 = vrot.slane %v720, %v773
  %v775 = vlaneseq
  %v776 = vshrl.u32 %v775, 7
  %v777 = vsub.s32 5, %v776
  %v778 = vrot.slane %v720, %v777
  %v779 = vlaneseq
  %v780 = vshrl.u32 %v779, 7
  %v781 = vsub.s32 6, %v780
  %v782 = vrot.slane %v720, %v781
  %v783 = vlaneseq
  %v784 = vshrl.u32 %v783, 7
  %v785 = vsub.s32 7, %v784
  %v786 = vrot.slane %v720, %v785
  %v803 = vmul.f32 %v538, %v726
  %v804 = vmul.f32 %v540, %v730
  %v805 = vmul.f32 %v542, %v734
  %v806 = vmul.f32 %v544, %v738
  %v807 = vmul.f32 %v546, %v742
  %v808 = vmul.f32 %v548, %v746
  %v809 = vmul.f32 %v550, %v750
  %v810 = vmul.f32 %v552, %v754
  %v811 = vmul.f32 %v554, %v758
  %v812 = vmul.f32 %v556, %v762
  %v813 = vmul.f32 %v558, %v766
  %v814 = vmul.f32 %v560, %v770
  %v815 = vmul.f32 %v562, %v774
  %v816 = vmul.f32 %v564, %v778
  %v817 = vmul.f32 %v566, %v782
  %v818 = vmul.f32 %v568, %v786
  %820 = vset.pattern.permute.xlu0 0
  %821 = vperm.xlu0 %820, %v803
  %v822 = vpop.permute.xlu0 %821
  %825 = vset.pattern.permute.xlu0 0
  %826 = vperm.xlu0 %825, %v804
  %v827 = vpop.permute.xlu0 %826
  %830 = vset.pattern.permute.xlu0 0
  %831 = vperm.xlu0 %830, %v805
  %v832 = vpop.permute.xlu0 %831
  %835 = vset.pattern.permute.xlu0 0
  %836 = vperm.xlu0 %835, %v806
  %v837 = vpop.permute.xlu0 %836
  %840 = vset.pattern.permute.xlu0 0
  %841 = vperm.xlu0 %840, %v807
  %v842 = vpop.permute.xlu0 %841
  %845 = vset.pattern.permute.xlu0 0
  %846 = vperm.xlu0 %845, %v808
  %v847 = vpop.permute.xlu0 %846
  %850 = vset.pattern.permute.xlu0 0
  %851 = vperm.xlu0 %850, %v809
  %v852 = vpop.permute.xlu0 %851
  %855 = vset.pattern.permute.xlu0 0
  %856 = vperm.xlu0 %855, %v810
  %v857 = vpop.permute.xlu0 %856
  %860 = vset.pattern.permute.xlu0 0
  %861 = vperm.xlu0 %860, %v811
  %v862 = vpop.permute.xlu0 %861
  %865 = vset.pattern.permute.xlu0 0
  %866 = vperm.xlu0 %865, %v812
  %v867 = vpop.permute.xlu0 %866
  %870 = vset.pattern.permute.xlu0 0
  %871 = vperm.xlu0 %870, %v813
  %v872 = vpop.permute.xlu0 %871
  %875 = vset.pattern.permute.xlu0 0
  %876 = vperm.xlu0 %875, %v814
  %v877 = vpop.permute.xlu0 %876
  %880 = vset.pattern.permute.xlu0 0
  %881 = vperm.xlu0 %880, %v815
  %v882 = vpop.permute.xlu0 %881
  %885 = vset.pattern.permute.xlu0 0
  %886 = vperm.xlu0 %885, %v816
  %v887 = vpop.permute.xlu0 %886
  %890 = vset.pattern.permute.xlu0 0
  %891 = vperm.xlu0 %890, %v817
  %v892 = vpop.permute.xlu0 %891
  %895 = vset.pattern.permute.xlu0 0
  %896 = vperm.xlu0 %895, %v818
  %v897 = vpop.permute.xlu0 %896
  %v899 = vmul.f32 %v822, %v17
  %v900 = vmul.f32 %v827, %v18
  %v901 = vmul.f32 %v832, %v19
  %v902 = vmul.f32 %v837, %v20
  %v903 = vmul.f32 %v842, %v21
  %v904 = vmul.f32 %v847, %v22
  %v905 = vmul.f32 %v852, %v23
  %v906 = vmul.f32 %v857, %v24
  %v907 = vmul.f32 %v862, %v25
  %v908 = vmul.f32 %v867, %v26
  %v909 = vmul.f32 %v872, %v27
  %v910 = vmul.f32 %v877, %v28
  %v911 = vmul.f32 %v882, %v29
  %v912 = vmul.f32 %v887, %v30
  %v913 = vmul.f32 %v892, %v31
  %v914 = vmul.f32 %v897, %v32
  %v915 = vsel %vm41, %v899, 0.0
  %v916 = vrot.slane %v915, 4
  %v917 = vadd.f32 %v915, %v916
  %v918 = vrot.slane %v917, 2
  %v919 = vadd.f32 %v917, %v918
  %v920 = vrot.slane %v919, 1
  %v921 = vadd.f32 %v919, %v920
  %v922 = vsel %vm41, %v900, 0.0
  %v923 = vrot.slane %v922, 4
  %v924 = vadd.f32 %v922, %v923
  %v925 = vrot.slane %v924, 2
  %v926 = vadd.f32 %v924, %v925
  %v927 = vrot.slane %v926, 1
  %v928 = vadd.f32 %v926, %v927
  %v929 = vsel %vm41, %v901, 0.0
  %v930 = vrot.slane %v929, 4
  %v931 = vadd.f32 %v929, %v930
  %v932 = vrot.slane %v931, 2
  %v933 = vadd.f32 %v931, %v932
  %v934 = vrot.slane %v933, 1
  %v935 = vadd.f32 %v933, %v934
  %v936 = vsel %vm41, %v902, 0.0
  %v937 = vrot.slane %v936, 4
  %v938 = vadd.f32 %v936, %v937
  %v939 = vrot.slane %v938, 2
  %v940 = vadd.f32 %v938, %v939
  %v941 = vrot.slane %v940, 1
  %v942 = vadd.f32 %v940, %v941
  %v943 = vsel %vm41, %v903, 0.0
  %v944 = vrot.slane %v943, 4
  %v945 = vadd.f32 %v943, %v944
  %v946 = vrot.slane %v945, 2
  %v947 = vadd.f32 %v945, %v946
  %v948 = vrot.slane %v947, 1
  %v949 = vadd.f32 %v947, %v948
  %v950 = vsel %vm41, %v904, 0.0
  %v951 = vrot.slane %v950, 4
  %v952 = vadd.f32 %v950, %v951
  %v953 = vrot.slane %v952, 2
  %v954 = vadd.f32 %v952, %v953
  %v955 = vrot.slane %v954, 1
  %v956 = vadd.f32 %v954, %v955
  %v957 = vsel %vm41, %v905, 0.0
  %v958 = vrot.slane %v957, 4
  %v959 = vadd.f32 %v957, %v958
  %v960 = vrot.slane %v959, 2
  %v961 = vadd.f32 %v959, %v960
  %v962 = vrot.slane %v961, 1
  %v963 = vadd.f32 %v961, %v962
  %v964 = vsel %vm41, %v906, 0.0
  %v965 = vrot.slane %v964, 4
  %v966 = vadd.f32 %v964, %v965
  %v967 = vrot.slane %v966, 2
  %v968 = vadd.f32 %v966, %v967
  %v969 = vrot.slane %v968, 1
  %v970 = vadd.f32 %v968, %v969
  %v971 = vsel %vm41, %v907, 0.0
  %v972 = vrot.slane %v971, 4
  %v973 = vadd.f32 %v971, %v972
  %v974 = vrot.slane %v973, 2
  %v975 = vadd.f32 %v973, %v974
  %v976 = vrot.slane %v975, 1
  %v977 = vadd.f32 %v975, %v976
  %v978 = vsel %vm41, %v908, 0.0
  %v979 = vrot.slane %v978, 4
  %v980 = vadd.f32 %v978, %v979
  %v981 = vrot.slane %v980, 2
  %v982 = vadd.f32 %v980, %v981
  %v983 = vrot.slane %v982, 1
  %v984 = vadd.f32 %v982, %v983
  %v985 = vsel %vm41, %v909, 0.0
  %v986 = vrot.slane %v985, 4
  %v987 = vadd.f32 %v985, %v986
  %v988 = vrot.slane %v987, 2
  %v989 = vadd.f32 %v987, %v988
  %v990 = vrot.slane %v989, 1
  %v991 = vadd.f32 %v989, %v990
  %v992 = vsel %vm41, %v910, 0.0
  %v993 = vrot.slane %v992, 4
  %v994 = vadd.f32 %v992, %v993
  %v995 = vrot.slane %v994, 2
  %v996 = vadd.f32 %v994, %v995
  %v997 = vrot.slane %v996, 1
  %v998 = vadd.f32 %v996, %v997
  %v999 = vsel %vm41, %v911, 0.0
  %v1000 = vrot.slane %v999, 4
  %v1001 = vadd.f32 %v999, %v1000
  %v1002 = vrot.slane %v1001, 2
  %v1003 = vadd.f32 %v1001, %v1002
  %v1004 = vrot.slane %v1003, 1
  %v1005 = vadd.f32 %v1003, %v1004
  %v1006 = vsel %vm41, %v912, 0.0
  %v1007 = vrot.slane %v1006, 4
  %v1008 = vadd.f32 %v1006, %v1007
  %v1009 = vrot.slane %v1008, 2
  %v1010 = vadd.f32 %v1008, %v1009
  %v1011 = vrot.slane %v1010, 1
  %v1012 = vadd.f32 %v1010, %v1011
  %v1013 = vsel %vm41, %v913, 0.0
  %v1014 = vrot.slane %v1013, 4
  %v1015 = vadd.f32 %v1013, %v1014
  %v1016 = vrot.slane %v1015, 2
  %v1017 = vadd.f32 %v1015, %v1016
  %v1018 = vrot.slane %v1017, 1
  %v1019 = vadd.f32 %v1017, %v1018
  %v1020 = vsel %vm41, %v914, 0.0
  %v1021 = vrot.slane %v1020, 4
  %v1022 = vadd.f32 %v1020, %v1021
  %v1023 = vrot.slane %v1022, 2
  %v1024 = vadd.f32 %v1022, %v1023
  %v1025 = vrot.slane %v1024, 1
  %v1026 = vadd.f32 %v1024, %v1025
  %v1043 = vsel %vm409, %v928, %v921
  %v1044 = vsel %vm411, %v935, %v1043
  %v1045 = vsel %vm413, %v942, %v1044
  %v1046 = vsel %vm415, %v949, %v1045
  %v1047 = vsel %vm417, %v956, %v1046
  %v1048 = vsel %vm419, %v963, %v1047
  %v1049 = vsel %vm421, %v970, %v1048
  %v1050 = vsel %vm409, %v984, %v977
  %v1051 = vsel %vm411, %v991, %v1050
  %v1052 = vsel %vm413, %v998, %v1051
  %v1053 = vsel %vm415, %v1005, %v1052
  %v1054 = vsel %vm417, %v1012, %v1053
  %v1055 = vsel %vm419, %v1019, %v1054
  %v1056 = vsel %vm421, %v1026, %v1055
  %1059 = vst.msk [vmem:[%s4] sm:$0xff] %vm41, %v1049
  %1060 = vst.msk [vmem:[%s4 + $0x8] sm:$0xff] %vm41, %v1056
  // Predicated region
  $region18: #{tpu_custom_call.1} parent=0 // pred_check
    _
  $region19: #{tpu_custom_call.1} parent=0 // pred_check_branch
    %1062 = sbr.rel (0) target = $region21
  $region20: #{tpu_custom_call.1} parent=0 // pred_region
    _
  $region21: #{tpu_custom_call.1} parent=0 // pred_fallthru
    _
  // Predicated region
  $region22: #{tpu_custom_call.1} parent=0 // pred_check
    _
  $region23: #{tpu_custom_call.1} parent=0 // pred_check_branch
    %1064 = sbr.rel (0) target = $region25
  $region24: #{tpu_custom_call.1} parent=0 // pred_region
    _
  $region25: #{tpu_custom_call.1} parent=0 // pred_fallthru
    _

</llo_original>
